<compile_context>
chip_gen: v6e
topology: v6e:2x2x1
jax: 0.10.0
libtpu: 0.0.40
codegen_flags: <defaults>
</compile_context>

<pallas_src>
import jax
import jax.numpy as jnp
from jax.experimental import pallas as pl
from jax.experimental.pallas import tpu as pltpu
import numpy as np

H = 50     # logical hidden size (from the module definition)
HP = 128   # lane-padded hidden size


def rnn_kernel(x_ref, w_hh_t_ref, packed_ref, out_ref):
    # x_ref:      (T, B)    time-major input (input_size == 1 squeezed out)
    # w_hh_t_ref: (HP, HP)  zero-padded W_hh^T
    # packed_ref: (4, HP)   rows: [W_ih^T pad, b_ih+b_hh pad, W_fc pad, [b_fc,0..]]
    # out_ref:    (B, 1)
    x_tm = x_ref[...]                        # (T, B)
    w_hh_t = w_hh_t_ref[...]                 # (HP, HP), loop-invariant
    packed = packed_ref[...]                 # (4, HP)
    w_ih_row = packed[0:1, :]                # (1, HP)
    bias = packed[1:2, :]                    # (1, HP)  fused b_ih + b_hh
    w_fc_row = packed[2:3, :]                # (1, HP)
    b_fc = packed[3:4, 0:1]                  # (1, 1)

    T, B = x_tm.shape

    # --- one-time input projection, kept in vregs (no VMEM scratch) ---------
    #   xw[t] = x[t] * W_ih^T + (b_ih + b_hh)          shape (T, B, HP)
    xw = x_tm[:, :, None] * w_ih_row[None, :, :] + bias[None, :, :]

    # --- serial recurrence, fully unrolled; h carried in registers ----------
    h = jnp.zeros((B, HP), jnp.float32)
    for t in range(T):                       # T is small & static -> full unroll
        h = jnp.tanh(xw[t] + jnp.dot(h, w_hh_t,
                                     preferred_element_type=jnp.float32))

    # --- final Linear(50, 1): VPU multiply + lane reduction ------------------
    # (padded lanes of h and w_fc_row are exactly zero -> result is exact)
    out_ref[...] = jnp.sum(h * w_fc_row, axis=-1, keepdims=True) + b_fc


def _pad_row(v):
    row = jnp.zeros((HP,), jnp.float32)
    return row.at[: v.shape[0]].set(v.astype(jnp.float32))


def rnn_forward(x, params):
    """x: (B, T, 1) float32 (batch_first, like PyTorch). Returns (B, 1)."""
    B, T, _ = x.shape
    x_tm = jnp.transpose(x[:, :, 0], (1, 0))                  # (T, B), no size-1 dim

    w_hh_t = jnp.zeros((HP, HP), jnp.float32).at[:H, :H].set(params["w_hh"].T)
    packed = jnp.stack(
        [
            _pad_row(params["w_ih"][:, 0]),               # W_ih^T row
            _pad_row(params["b_ih"] + params["b_hh"]),    # fused bias
            _pad_row(params["w_fc"][0, :]),               # W_fc row
            _pad_row(params["b_fc"]),                     # b_fc at lane 0
        ],
        axis=0,
    )                                                      # (4, HP)

    vmem = pltpu.MemorySpace.VMEM
    # TODO(synk): for large T*B, tile x over T with a grid (h in a persistent
    # scratch across an "arbitrary" T axis) to stay inside v7x's 64 MiB VMEM;
    # unnecessary at these sizes (everything here is < 100 KiB).
    return pl.pallas_call(
        rnn_kernel,
        out_shape=jax.ShapeDtypeStruct((B, 1), jnp.float32),
        in_specs=[pl.BlockSpec(memory_space=vmem)] * 3,    # everything resident
        out_specs=pl.BlockSpec(memory_space=vmem),
    )(x_tm, w_hh_t, packed)


def rnn_reference(x, params):
    """Pure-JAX reference mirroring the PyTorch forward (unpadded H=50)."""
    B, T, _ = x.shape
    h = jnp.zeros((B, H), jnp.float32)
    for t in range(T):
        h = jnp.tanh(x[:, t, :] @ params["w_ih"].T + params["b_ih"]
                     + h @ params["w_hh"].T + params["b_hh"])
    return h @ params["w_fc"].T + params["b_fc"]


def init_params(key):
    """Deterministic init matching PyTorch parameter shapes."""
    k = jax.random.split(key, 6)
    s = 1.0 / np.sqrt(H)  # PyTorch default uniform(-1/sqrt(H), 1/sqrt(H))
    return {
        "w_ih": jax.random.uniform(k[0], (H, 1), jnp.float32, -s, s),
        "w_hh": jax.random.uniform(k[1], (H, H), jnp.float32, -s, s),
        "b_ih": jax.random.uniform(k[2], (H,), jnp.float32, -s, s),
        "b_hh": jax.random.uniform(k[3], (H,), jnp.float32, -s, s),
        "w_fc": jax.random.uniform(k[4], (1, H), jnp.float32, -s, s),
        "b_fc": jax.random.uniform(k[5], (1,), jnp.float32, -s, s),
    }


if __name__ == "__main__":
    key = jax.random.PRNGKey(0)
    kx, kp = jax.random.split(key)

    B, T = 8, 12
    x = jax.random.normal(kx, (B, T, 1), jnp.float32)
    params = init_params(kp)

    out = rnn_forward(x, params)
    out = jax.block_until_ready(out)

    ref = rnn_reference(x, params)
    np.testing.assert_allclose(np.asarray(out), np.asarray(ref),
                               rtol=1e-5, atol=1e-5)
    print("KERNEL_OK")
</pallas_src>

<mosaic_0001>
module attributes {stable_mosaic.version = 11 : i64} {
  func.func @rnn_kernel(%arg0: memref<12x8xf32, #tpu.memory_space<vmem>>, %arg1: memref<128x128xf32, #tpu.memory_space<vmem>>, %arg2: memref<4x128xf32, #tpu.memory_space<vmem>>, %arg3: memref<8x1xf32, #tpu.memory_space<vmem>>) attributes {dimension_semantics = [], scalar_prefetch = 0 : i64, scratch_operands = 0 : i64, tpu.core_type = #tpu.core_type<tc>} {
    %c0 = arith.constant 0 : index
    %c0_0 = arith.constant 0 : index
    %0 = vector.load %arg0[%c0, %c0_0] : memref<12x8xf32, #tpu.memory_space<vmem>>, vector<12x8xf32>
    %c0_1 = arith.constant 0 : index
    %c0_2 = arith.constant 0 : index
    %1 = vector.load %arg1[%c0_1, %c0_2] : memref<128x128xf32, #tpu.memory_space<vmem>>, vector<128x128xf32>
    %c0_3 = arith.constant 0 : index
    %c0_4 = arith.constant 0 : index
    %2 = vector.load %arg2[%c0_3, %c0_4] : memref<4x128xf32, #tpu.memory_space<vmem>>, vector<4x128xf32>
    %3 = vector.extract_strided_slice %2 {offsets = [0, 0], sizes = [1, 128], strides = [1, 1]} : vector<4x128xf32> to vector<1x128xf32>
    %4 = vector.extract_strided_slice %2 {offsets = [1, 0], sizes = [1, 128], strides = [1, 1]} : vector<4x128xf32> to vector<1x128xf32>
    %5 = vector.extract_strided_slice %2 {offsets = [2, 0], sizes = [1, 128], strides = [1, 1]} : vector<4x128xf32> to vector<1x128xf32>
    %6 = vector.extract_strided_slice %2 {offsets = [3, 0], sizes = [1, 1], strides = [1, 1]} : vector<4x128xf32> to vector<1x1xf32>
    %7 = vector.shape_cast %0 : vector<12x8xf32> to vector<12x8x1xf32>
    %8 = vector.shape_cast %3 : vector<1x128xf32> to vector<1x1x128xf32>
    %9 = vector.broadcast %7 : vector<12x8x1xf32> to vector<12x8x128xf32>
    %10 = vector.broadcast %8 : vector<1x1x128xf32> to vector<12x8x128xf32>
    %11 = arith.mulf %9, %10 : vector<12x8x128xf32>
    %12 = vector.shape_cast %4 : vector<1x128xf32> to vector<1x1x128xf32>
    %13 = vector.broadcast %12 : vector<1x1x128xf32> to vector<12x8x128xf32>
    %14 = arith.addf %11, %13 : vector<12x8x128xf32>
    %cst = arith.constant 0.000000e+00 : f32
    %15 = vector.broadcast %cst : f32 to vector<8x128xf32>
    %16 = vector.extract_strided_slice %14 {offsets = [0, 0, 0], sizes = [1, 8, 128], strides = [1, 1, 1]} : vector<12x8x128xf32> to vector<1x8x128xf32>
    %17 = vector.shape_cast %16 : vector<1x8x128xf32> to vector<8x128xf32>
    %cst_5 = arith.constant dense<0.000000e+00> : vector<8x128xf32>
    %18 = tpu.matmul %15, %1, %cst_5 {dimension_numbers = #tpu.dot_dimension_numbers<[1], [0], [0], [1], [0, 0, 1, 1], [], []>} : vector<8x128xf32>, vector<128x128xf32>, vector<8x128xf32> -> vector<8x128xf32>
    %19 = arith.addf %17, %18 : vector<8x128xf32>
    %20 = math.tanh %19 : vector<8x128xf32>
    %21 = vector.extract_strided_slice %14 {offsets = [1, 0, 0], sizes = [1, 8, 128], strides = [1, 1, 1]} : vector<12x8x128xf32> to vector<1x8x128xf32>
    %22 = vector.shape_cast %21 : vector<1x8x128xf32> to vector<8x128xf32>
    %cst_6 = arith.constant dense<0.000000e+00> : vector<8x128xf32>
    %23 = tpu.matmul %20, %1, %cst_6 {dimension_numbers = #tpu.dot_dimension_numbers<[1], [0], [0], [1], [0, 0, 1, 1], [], []>} : vector<8x128xf32>, vector<128x128xf32>, vector<8x128xf32> -> vector<8x128xf32>
    %24 = arith.addf %22, %23 : vector<8x128xf32>
    %25 = math.tanh %24 : vector<8x128xf32>
    %26 = vector.extract_strided_slice %14 {offsets = [2, 0, 0], sizes = [1, 8, 128], strides = [1, 1, 1]} : vector<12x8x128xf32> to vector<1x8x128xf32>
    %27 = vector.shape_cast %26 : vector<1x8x128xf32> to vector<8x128xf32>
    %cst_7 = arith.constant dense<0.000000e+00> : vector<8x128xf32>
    %28 = tpu.matmul %25, %1, %cst_7 {dimension_numbers = #tpu.dot_dimension_numbers<[1], [0], [0], [1], [0, 0, 1, 1], [], []>} : vector<8x128xf32>, vector<128x128xf32>, vector<8x128xf32> -> vector<8x128xf32>
    %29 = arith.addf %27, %28 : vector<8x128xf32>
    %30 = math.tanh %29 : vector<8x128xf32>
    %31 = vector.extract_strided_slice %14 {offsets = [3, 0, 0], sizes = [1, 8, 128], strides = [1, 1, 1]} : vector<12x8x128xf32> to vector<1x8x128xf32>
    %32 = vector.shape_cast %31 : vector<1x8x128xf32> to vector<8x128xf32>
    %cst_8 = arith.constant dense<0.000000e+00> : vector<8x128xf32>
    %33 = tpu.matmul %30, %1, %cst_8 {dimension_numbers = #tpu.dot_dimension_numbers<[1], [0], [0], [1], [0, 0, 1, 1], [], []>} : vector<8x128xf32>, vector<128x128xf32>, vector<8x128xf32> -> vector<8x128xf32>
    %34 = arith.addf %32, %33 : vector<8x128xf32>
    %35 = math.tanh %34 : vector<8x128xf32>
    %36 = vector.extract_strided_slice %14 {offsets = [4, 0, 0], sizes = [1, 8, 128], strides = [1, 1, 1]} : vector<12x8x128xf32> to vector<1x8x128xf32>
    %37 = vector.shape_cast %36 : vector<1x8x128xf32> to vector<8x128xf32>
    %cst_9 = arith.constant dense<0.000000e+00> : vector<8x128xf32>
    %38 = tpu.matmul %35, %1, %cst_9 {dimension_numbers = #tpu.dot_dimension_numbers<[1], [0], [0], [1], [0, 0, 1, 1], [], []>} : vector<8x128xf32>, vector<128x128xf32>, vector<8x128xf32> -> vector<8x128xf32>
    %39 = arith.addf %37, %38 : vector<8x128xf32>
    %40 = math.tanh %39 : vector<8x128xf32>
    %41 = vector.extract_strided_slice %14 {offsets = [5, 0, 0], sizes = [1, 8, 128], strides = [1, 1, 1]} : vector<12x8x128xf32> to vector<1x8x128xf32>
    %42 = vector.shape_cast %41 : vector<1x8x128xf32> to vector<8x128xf32>
    %cst_10 = arith.constant dense<0.000000e+00> : vector<8x128xf32>
    %43 = tpu.matmul %40, %1, %cst_10 {dimension_numbers = #tpu.dot_dimension_numbers<[1], [0], [0], [1], [0, 0, 1, 1], [], []>} : vector<8x128xf32>, vector<128x128xf32>, vector<8x128xf32> -> vector<8x128xf32>
    %44 = arith.addf %42, %43 : vector<8x128xf32>
    %45 = math.tanh %44 : vector<8x128xf32>
    %46 = vector.extract_strided_slice %14 {offsets = [6, 0, 0], sizes = [1, 8, 128], strides = [1, 1, 1]} : vector<12x8x128xf32> to vector<1x8x128xf32>
    %47 = vector.shape_cast %46 : vector<1x8x128xf32> to vector<8x128xf32>
    %cst_11 = arith.constant dense<0.000000e+00> : vector<8x128xf32>
    %48 = tpu.matmul %45, %1, %cst_11 {dimension_numbers = #tpu.dot_dimension_numbers<[1], [0], [0], [1], [0, 0, 1, 1], [], []>} : vector<8x128xf32>, vector<128x128xf32>, vector<8x128xf32> -> vector<8x128xf32>
    %49 = arith.addf %47, %48 : vector<8x128xf32>
    %50 = math.tanh %49 : vector<8x128xf32>
    %51 = vector.extract_strided_slice %14 {offsets = [7, 0, 0], sizes = [1, 8, 128], strides = [1, 1, 1]} : vector<12x8x128xf32> to vector<1x8x128xf32>
    %52 = vector.shape_cast %51 : vector<1x8x128xf32> to vector<8x128xf32>
    %cst_12 = arith.constant dense<0.000000e+00> : vector<8x128xf32>
    %53 = tpu.matmul %50, %1, %cst_12 {dimension_numbers = #tpu.dot_dimension_numbers<[1], [0], [0], [1], [0, 0, 1, 1], [], []>} : vector<8x128xf32>, vector<128x128xf32>, vector<8x128xf32> -> vector<8x128xf32>
    %54 = arith.addf %52, %53 : vector<8x128xf32>
    %55 = math.tanh %54 : vector<8x128xf32>
    %56 = vector.extract_strided_slice %14 {offsets = [8, 0, 0], sizes = [1, 8, 128], strides = [1, 1, 1]} : vector<12x8x128xf32> to vector<1x8x128xf32>
    %57 = vector.shape_cast %56 : vector<1x8x128xf32> to vector<8x128xf32>
    %cst_13 = arith.constant dense<0.000000e+00> : vector<8x128xf32>
    %58 = tpu.matmul %55, %1, %cst_13 {dimension_numbers = #tpu.dot_dimension_numbers<[1], [0], [0], [1], [0, 0, 1, 1], [], []>} : vector<8x128xf32>, vector<128x128xf32>, vector<8x128xf32> -> vector<8x128xf32>
    %59 = arith.addf %57, %58 : vector<8x128xf32>
    %60 = math.tanh %59 : vector<8x128xf32>
    %61 = vector.extract_strided_slice %14 {offsets = [9, 0, 0], sizes = [1, 8, 128], strides = [1, 1, 1]} : vector<12x8x128xf32> to vector<1x8x128xf32>
    %62 = vector.shape_cast %61 : vector<1x8x128xf32> to vector<8x128xf32>
    %cst_14 = arith.constant dense<0.000000e+00> : vector<8x128xf32>
    %63 = tpu.matmul %60, %1, %cst_14 {dimension_numbers = #tpu.dot_dimension_numbers<[1], [0], [0], [1], [0, 0, 1, 1], [], []>} : vector<8x128xf32>, vector<128x128xf32>, vector<8x128xf32> -> vector<8x128xf32>
    %64 = arith.addf %62, %63 : vector<8x128xf32>
    %65 = math.tanh %64 : vector<8x128xf32>
    %66 = vector.extract_strided_slice %14 {offsets = [10, 0, 0], sizes = [1, 8, 128], strides = [1, 1, 1]} : vector<12x8x128xf32> to vector<1x8x128xf32>
    %67 = vector.shape_cast %66 : vector<1x8x128xf32> to vector<8x128xf32>
    %cst_15 = arith.constant dense<0.000000e+00> : vector<8x128xf32>
    %68 = tpu.matmul %65, %1, %cst_15 {dimension_numbers = #tpu.dot_dimension_numbers<[1], [0], [0], [1], [0, 0, 1, 1], [], []>} : vector<8x128xf32>, vector<128x128xf32>, vector<8x128xf32> -> vector<8x128xf32>
    %69 = arith.addf %67, %68 : vector<8x128xf32>
    %70 = math.tanh %69 : vector<8x128xf32>
    %71 = vector.extract_strided_slice %14 {offsets = [11, 0, 0], sizes = [1, 8, 128], strides = [1, 1, 1]} : vector<12x8x128xf32> to vector<1x8x128xf32>
    %72 = vector.shape_cast %71 : vector<1x8x128xf32> to vector<8x128xf32>
    %cst_16 = arith.constant dense<0.000000e+00> : vector<8x128xf32>
    %73 = tpu.matmul %70, %1, %cst_16 {dimension_numbers = #tpu.dot_dimension_numbers<[1], [0], [0], [1], [0, 0, 1, 1], [], []>} : vector<8x128xf32>, vector<128x128xf32>, vector<8x128xf32> -> vector<8x128xf32>
    %74 = arith.addf %72, %73 : vector<8x128xf32>
    %75 = math.tanh %74 : vector<8x128xf32>
    %76 = vector.broadcast %5 : vector<1x128xf32> to vector<8x128xf32>
    %77 = arith.mulf %75, %76 : vector<8x128xf32>
    %cst_17 = arith.constant dense<0.000000e+00> : vector<8xf32>
    %78 = vector.multi_reduction <add>, %77, %cst_17 [1] : vector<8x128xf32> to vector<8xf32>
    %79 = vector.shape_cast %78 : vector<8xf32> to vector<8x1xf32>
    %80 = vector.broadcast %6 : vector<1x1xf32> to vector<8x1xf32>
    %81 = arith.addf %79, %80 : vector<8x1xf32>
    %c0_18 = arith.constant 0 : index
    %c0_19 = arith.constant 0 : index
    %82 = vector.load %arg3[%c0_18, %c0_19] : memref<8x1xf32, #tpu.memory_space<vmem>>, vector<8x1xf32>
    tpu.vector_store %arg3[%c0_18, %c0_19], %81 {strides = array<i32>} : memref<8x1xf32, #tpu.memory_space<vmem>>, vector<8x1xf32>,
    return
  }
}

</mosaic_0001>

<llo_original>
// kernel: tpu_custom_call.1
$region0: #{tpu_custom_call.1}
  #allocation0 [shape = 'u32[]', space=smem, size = 0x4, offset = 0x4, fixed_abs, tag = 'smem constant byte address 0x4 - core index']
  #allocation1 [shape = 'u32[144,128]{1,0:T(1,128)}', space=vmem, size = 0x12000, scoped, tag = 'internal scratch']
  %s0 = inlined_call_operand.vmem [shape: f32[12,8], index: 0, kind: input, shape index: {}]
  %s1 = inlined_call_operand.hbm [shape: f32[128,128], index: 1, kind: input, shape index: {}]
  %s2 = inlined_call_operand.vmem [shape: f32[4,128], index: 2, kind: input, shape index: {}]
  %s3 = inlined_call_operand.vmem [shape: f32[8,1], index: 3, kind: output, shape index: {}]
  %s4 = sld [smem:[#allocation0]]
  $region26: #{tpu_custom_call.1} parent=0
    _
  %s6 = ssub.s32 1, %s4
  %s7 = scalar_select 0, %s6, %s4
  $region1: #{tpu_custom_call.1} parent=0
    #allocation2 [shape = 'u8[65536]{0}', space=vmem, size = 0x10000, scoped, tag = 'input window, operand 1, single buffered']
    #allocation3 [shape = 's32[1]{0}', space=sflag, size = 0x4, scoped, tag = 'scoped memory for tpu_custom_call.1']
    %8 = vsyncpa [#allocation3], 0
    // Predicated region
    $region2: #{tpu_custom_call.1} parent=1 // pred_check
      _
    $region3: #{tpu_custom_call.1} parent=1 // pred_check_branch
      %10 = sbr.rel (0) target = $region5
    $region4: #{tpu_custom_call.1} parent=1 // pred_region
      _
    $region5: #{tpu_custom_call.1} parent=1 // pred_fallthru
      _
    // Predicated region
    $region6: #{tpu_custom_call.1} parent=1 // pred_check
      _
    $region7: #{tpu_custom_call.1} parent=1 // pred_check_branch
      %12 = sbr.rel (0) target = $region9
    $region8: #{tpu_custom_call.1} parent=1 // pred_region
      %s14 = ssub.s32 2048, 2048
      %15 = vsyncadd [#allocation3], %s14
      %s16 = sshll.u32 [#allocation2], 4
      %s17 = int_to_ptr.vmem [resolvable:$true] %s16
      %22 = dma.hbm_to_vmem [thread:$0]  %s1, 2048, %s17, [#allocation3], 128, 128, 8
    $region9: #{tpu_custom_call.1} parent=1 // pred_fallthru
      _
    // Predicated region
    $region10: #{tpu_custom_call.1} parent=1 // pred_check
      _
    $region11: #{tpu_custom_call.1} parent=1 // pred_check_branch
      %24 = sbr.rel (0) target = $region13
    $region12: #{tpu_custom_call.1} parent=1 // pred_region
      _
    $region13: #{tpu_custom_call.1} parent=1 // pred_fallthru
      _
    // Predicated region
    $region14: #{tpu_custom_call.1} parent=1 // pred_check
      _
    $region15: #{tpu_custom_call.1} parent=1 // pred_check_branch
      %26 = sbr.rel (0) target = $region17
    $region16: #{tpu_custom_call.1} parent=1 // pred_region
      %27 = dma.done [#allocation3], 2048
    $region17: #{tpu_custom_call.1} parent=1 // pred_fallthru
      _
    %v28 = vld [vmem:[%s0] sm:$0xff]
    %v29 = vld [vmem:[%s0 + $0x8] sm:$0xf]
    %v30 = vld [vmem:[#allocation2] sm:$0xff]
    %v31 = vld [vmem:[#allocation2 + $0x8] sm:$0xff]
    %v32 = vld [vmem:[#allocation2 + $0x10] sm:$0xff]
    %v33 = vld [vmem:[#allocation2 + $0x18] sm:$0xff]
    %v34 = vld [vmem:[#allocation2 + $0x20] sm:$0xff]
    %v35 = vld [vmem:[#allocation2 + $0x28] sm:$0xff]
    %v36 = vld [vmem:[#allocation2 + $0x30] sm:$0xff]
    %v37 = vld [vmem:[#allocation2 + $0x38] sm:$0xff]
    %v38 = vld [vmem:[#allocation2 + $0x40] sm:$0xff]
    %v39 = vld [vmem:[#allocation2 + $0x48] sm:$0xff]
    %v40 = vld [vmem:[#allocation2 + $0x50] sm:$0xff]
    %v41 = vld [vmem:[#allocation2 + $0x58] sm:$0xff]
    %v42 = vld [vmem:[#allocation2 + $0x60] sm:$0xff]
    %v43 = vld [vmem:[#allocation2 + $0x68] sm:$0xff]
    %v44 = vld [vmem:[#allocation2 + $0x70] sm:$0xff]
    %v45 = vld [vmem:[#allocation2 + $0x78] sm:$0xff]
    %v46 = vld [vmem:[%s2] sm:$0xf]
    %v47 = vlaneseq
    %v48 = vshrl.u32 %v47, 7
    %v49 = vsub.s32 0, %v48
    %v50 = vrot.slane %v28, %v49
    %52 = vbcast.lane.b32.xlu0 %v50, 256
    %v53 = vpop.permute.xlu0 %52
    %v54 = vlaneseq
    %v55 = vshrl.u32 %v54, 7
    %v56 = vsub.s32 1, %v55
    %v57 = vrot.slane %v28, %v56
    %59 = vbcast.lane.b32.xlu0 %v57, 256
    %v60 = vpop.permute.xlu0 %59
    %v61 = vlaneseq
    %v62 = vshrl.u32 %v61, 7
    %v63 = vsub.s32 2, %v62
    %v64 = vrot.slane %v28, %v63
    %66 = vbcast.lane.b32.xlu0 %v64, 256
    %v67 = vpop.permute.xlu0 %66
    %v68 = vlaneseq
    %v69 = vshrl.u32 %v68, 7
    %v70 = vsub.s32 3, %v69
    %v71 = vrot.slane %v28, %v70
    %73 = vbcast.lane.b32.xlu0 %v71, 256
    %v74 = vpop.permute.xlu0 %73
    %v75 = vlaneseq
    %v76 = vshrl.u32 %v75, 7
    %v77 = vsub.s32 4, %v76
    %v78 = vrot.slane %v28, %v77
    %80 = vbcast.lane.b32.xlu0 %v78, 256
    %v81 = vpop.permute.xlu0 %80
    %v82 = vlaneseq
    %v83 = vshrl.u32 %v82, 7
    %v84 = vsub.s32 5, %v83
    %v85 = vrot.slane %v28, %v84
    %87 = vbcast.lane.b32.xlu0 %v85, 256
    %v88 = vpop.permute.xlu0 %87
    %v89 = vlaneseq
    %v90 = vshrl.u32 %v89, 7
    %v91 = vsub.s32 6, %v90
    %v92 = vrot.slane %v28, %v91
    %94 = vbcast.lane.b32.xlu0 %v92, 256
    %v95 = vpop.permute.xlu0 %94
    %v96 = vlaneseq
    %v97 = vshrl.u32 %v96, 7
    %v98 = vsub.s32 7, %v97
    %v99 = vrot.slane %v28, %v98
    %101 = vbcast.lane.b32.xlu0 %v99, 256
    %v102 = vpop.permute.xlu0 %101
    %v103 = vlaneseq
    %v104 = vshrl.u32 %v103, 7
    %v105 = vsub.s32 0, %v104
    %v106 = vrot.slane %v29, %v105
    %108 = vbcast.lane.b32.xlu0 %v106, 256
    %v109 = vpop.permute.xlu0 %108
    %v110 = vlaneseq
    %v111 = vshrl.u32 %v110, 7
    %v112 = vsub.s32 1, %v111
    %v113 = vrot.slane %v29, %v112
    %115 = vbcast.lane.b32.xlu0 %v113, 256
    %v116 = vpop.permute.xlu0 %115
    %v117 = vlaneseq
    %v118 = vshrl.u32 %v117, 7
    %v119 = vsub.s32 2, %v118
    %v120 = vrot.slane %v29, %v119
    %122 = vbcast.lane.b32.xlu0 %v120, 256
    %v123 = vpop.permute.xlu0 %122
    %v124 = vlaneseq
    %v125 = vshrl.u32 %v124, 7
    %v126 = vsub.s32 3, %v125
    %v127 = vrot.slane %v29, %v126
    %129 = vbcast.lane.b32.xlu0 %v127, 256
    %v130 = vpop.permute.xlu0 %129
    %v131 = vlaneseq
    %v132 = vshrl.u32 %v131, 7
    %v133 = vsub.s32 0, %v132
    %v134 = vrot.slane %v46, %v133
    %v135 = vmul.f32 %v53, %v134
    %v136 = vmul.f32 %v60, %v134
    %v137 = vmul.f32 %v67, %v134
    %v138 = vmul.f32 %v74, %v134
    %v139 = vmul.f32 %v81, %v134
    %v140 = vmul.f32 %v88, %v134
    %v141 = vmul.f32 %v95, %v134
    %v142 = vmul.f32 %v102, %v134
    %v143 = vmul.f32 %v109, %v134
    %v144 = vmul.f32 %v116, %v134
    %v145 = vmul.f32 %v123, %v134
    %v146 = vmul.f32 %v130, %v134
    %v147 = vlaneseq
    %v148 = vshrl.u32 %v147, 7
    %v149 = vsub.s32 1, %v148
    %v150 = vrot.slane %v46, %v149
    %v151 = vadd.f32 %v135, %v150
    %v152 = vadd.f32 %v136, %v150
    %v153 = vadd.f32 %v137, %v150
    %v154 = vadd.f32 %v138, %v150
    %v155 = vadd.f32 %v139, %v150
    %v156 = vadd.f32 %v140, %v150
    %v157 = vadd.f32 %v141, %v150
    %v158 = vadd.f32 %v142, %v150
    %v159 = vadd.f32 %v143, %v150
    %v160 = vadd.f32 %v144, %v150
    %v161 = vadd.f32 %v145, %v150
    %v162 = vadd.f32 %v146, %v150
    %163 = vmatprep.subr.mxu0 0.0
    %164 = vmatpush1.msra.mxu0 %v45
    %165 = vmatprep.subr.mxu0 0.0
    %166 = vmatpush1.msra.mxu0 %v44
    %167 = vmatprep.subr.mxu0 0.0
    %168 = vmatpush1.msra.mxu0 %v43
    %169 = vmatprep.subr.mxu0 0.0
    %170 = vmatpush1.msra.mxu0 %v42
    %171 = vmatprep.subr.mxu0 0.0
    %172 = vmatpush1.msra.mxu0 %v41
    %173 = vmatprep.subr.mxu0 0.0
    %174 = vmatpush1.msra.mxu0 %v40
    %175 = vmatprep.subr.mxu0 0.0
    %176 = vmatpush1.msra.mxu0 %v39
    %177 = vmatprep.subr.mxu0 0.0
    %178 = vmatpush1.msra.mxu0 %v38
    %179 = vmatprep.subr.mxu0 0.0
    %180 = vmatpush1.msra.mxu0 %v37
    %181 = vmatprep.subr.mxu0 0.0
    %182 = vmatpush1.msra.mxu0 %v36
    %183 = vmatprep.subr.mxu0 0.0
    %184 = vmatpush1.msra.mxu0 %v35
    %185 = vmatprep.subr.mxu0 0.0
    %186 = vmatpush1.msra.mxu0 %v34
    %187 = vmatprep.subr.mxu0 0.0
    %188 = vmatpush1.msra.mxu0 %v33
    %189 = vmatprep.subr.mxu0 0.0
    %190 = vmatpush1.msra.mxu0 %v32
    %191 = vmatprep.subr.mxu0 0.0
    %192 = vmatpush1.msra.mxu0 %v31
    %193 = vmatprep.subr.mxu0 0.0
    %194 = vmatpush1.msra.mxu0 %v30
    %195 = vmatprep.subr.mxu0 0.0
    %196 = vmatpush2.msra.mxu0 0.0
    %197 = vmatprep.subr.mxu0 0.0
    %198 = vmatpush2.msra.mxu0 0.0
    %199 = vmatprep.subr.mxu0 0.0
    %200 = vmatpush2.msra.mxu0 0.0
    %201 = vmatprep.subr.mxu0 0.0
    %202 = vmatpush2.msra.mxu0 0.0
    %203 = vmatprep.subr.mxu0 0.0
    %204 = vmatpush2.msra.mxu0 0.0
    %205 = vmatprep.subr.mxu0 0.0
    %206 = vmatpush2.msra.mxu0 0.0
    %207 = vmatprep.subr.mxu0 0.0
    %208 = vmatpush2.msra.mxu0 0.0
    %209 = vmatprep.subr.mxu0 0.0
    %210 = vmatpush2.msra.mxu0 0.0
    %211 = vmatprep.subr.mxu0 0.0
    %212 = vmatpush2.msra.mxu0 0.0
    %213 = vmatprep.subr.mxu0 0.0
    %214 = vmatpush2.msra.mxu0 0.0
    %215 = vmatprep.subr.mxu0 0.0
    %216 = vmatpush2.msra.mxu0 0.0
    %217 = vmatprep.subr.mxu0 0.0
    %218 = vmatpush2.msra.mxu0 0.0
    %219 = vmatprep.subr.mxu0 0.0
    %220 = vmatpush2.msra.mxu0 0.0
    %221 = vmatprep.subr.mxu0 0.0
    %222 = vmatpush2.msra.mxu0 0.0
    %223 = vmatprep.subr.mxu0 0.0
    %224 = vmatpush2.msra.mxu0 0.0
    %225 = vmatprep.subr.mxu0 0.0
    %226 = vmatpush2.msra.mxu0 0.0
    %227 = vmatprep.mubr.f32.mxu0 0.0
    %228 = vmatmul.mubr.f32.gmra.mxu0 0.0
    %v229 = vpop.f32.mrf.mxu0
    %v230 = vadd.f32 0.0, %v229
    %v231 = vpop.f32.mrf.mxu0
    %232 = vdwg.mxu0
    %v233 = vadd.f32 %v151, %v230
    %v234 = vtanh.pop %v233
    %235 = vmatprep.subr.mxu0 0.0
    %236 = vmatpush1.msra.mxu0 %v45
    %237 = vmatprep.subr.mxu0 0.0
    %238 = vmatpush1.msra.mxu0 %v44
    %239 = vmatprep.subr.mxu0 0.0
    %240 = vmatpush1.msra.mxu0 %v43
    %241 = vmatprep.subr.mxu0 0.0
    %242 = vmatpush1.msra.mxu0 %v42
    %243 = vmatprep.subr.mxu0 0.0
    %244 = vmatpush1.msra.mxu0 %v41
    %245 = vmatprep.subr.mxu0 0.0
    %246 = vmatpush1.msra.mxu0 %v40
    %247 = vmatprep.subr.mxu0 0.0
    %248 = vmatpush1.msra.mxu0 %v39
    %249 = vmatprep.subr.mxu0 0.0
    %250 = vmatpush1.msra.mxu0 %v38
    %251 = vmatprep.subr.mxu0 0.0
    %252 = vmatpush1.msra.mxu0 %v37
    %253 = vmatprep.subr.mxu0 0.0
    %254 = vmatpush1.msra.mxu0 %v36
    %255 = vmatprep.subr.mxu0 0.0
    %256 = vmatpush1.msra.mxu0 %v35
    %257 = vmatprep.subr.mxu0 0.0
    %258 = vmatpush1.msra.mxu0 %v34
    %259 = vmatprep.subr.mxu0 0.0
    %260 = vmatpush1.msra.mxu0 %v33
    %261 = vmatprep.subr.mxu0 0.0
    %262 = vmatpush1.msra.mxu0 %v32
    %263 = vmatprep.subr.mxu0 0.0
    %264 = vmatpush1.msra.mxu0 %v31
    %265 = vmatprep.subr.mxu0 0.0
    %266 = vmatpush1.msra.mxu0 %v30
    %267 = vmatprep.subr.mxu0 0.0
    %268 = vmatpush2.msra.mxu0 0.0
    %269 = vmatprep.subr.mxu0 0.0
    %270 = vmatpush2.msra.mxu0 0.0
    %271 = vmatprep.subr.mxu0 0.0
    %272 = vmatpush2.msra.mxu0 0.0
    %273 = vmatprep.subr.mxu0 0.0
    %274 = vmatpush2.msra.mxu0 0.0
    %275 = vmatprep.subr.mxu0 0.0
    %276 = vmatpush2.msra.mxu0 0.0
    %277 = vmatprep.subr.mxu0 0.0
    %278 = vmatpush2.msra.mxu0 0.0
    %279 = vmatprep.subr.mxu0 0.0
    %280 = vmatpush2.msra.mxu0 0.0
    %281 = vmatprep.subr.mxu0 0.0
    %282 = vmatpush2.msra.mxu0 0.0
    %283 = vmatprep.subr.mxu0 0.0
    %284 = vmatpush2.msra.mxu0 0.0
    %285 = vmatprep.subr.mxu0 0.0
    %286 = vmatpush2.msra.mxu0 0.0
    %287 = vmatprep.subr.mxu0 0.0
    %288 = vmatpush2.msra.mxu0 0.0
    %289 = vmatprep.subr.mxu0 0.0
    %290 = vmatpush2.msra.mxu0 0.0
    %291 = vmatprep.subr.mxu0 0.0
    %292 = vmatpush2.msra.mxu0 0.0
    %293 = vmatprep.subr.mxu0 0.0
    %294 = vmatpush2.msra.mxu0 0.0
    %295 = vmatprep.subr.mxu0 0.0
    %296 = vmatpush2.msra.mxu0 0.0
    %297 = vmatprep.subr.mxu0 0.0
    %298 = vmatpush2.msra.mxu0 0.0
    %299 = vmatprep.mubr.f32.mxu0 0.0
    %300 = vmatmul.mubr.f32.gmra.mxu0 %v234
    %v301 = vpop.f32.mrf.mxu0
    %v302 = vadd.f32 0.0, %v301
    %v303 = vpop.f32.mrf.mxu0
    %304 = vdwg.mxu0
    %v305 = vadd.f32 %v152, %v302
    %v306 = vtanh.pop %v305
    %307 = vmatprep.subr.mxu0 0.0
    %308 = vmatpush1.msra.mxu0 %v45
    %309 = vmatprep.subr.mxu0 0.0
    %310 = vmatpush1.msra.mxu0 %v44
    %311 = vmatprep.subr.mxu0 0.0
    %312 = vmatpush1.msra.mxu0 %v43
    %313 = vmatprep.subr.mxu0 0.0
    %314 = vmatpush1.msra.mxu0 %v42
    %315 = vmatprep.subr.mxu0 0.0
    %316 = vmatpush1.msra.mxu0 %v41
    %317 = vmatprep.subr.mxu0 0.0
    %318 = vmatpush1.msra.mxu0 %v40
    %319 = vmatprep.subr.mxu0 0.0
    %320 = vmatpush1.msra.mxu0 %v39
    %321 = vmatprep.subr.mxu0 0.0
    %322 = vmatpush1.msra.mxu0 %v38
    %323 = vmatprep.subr.mxu0 0.0
    %324 = vmatpush1.msra.mxu0 %v37
    %325 = vmatprep.subr.mxu0 0.0
    %326 = vmatpush1.msra.mxu0 %v36
    %327 = vmatprep.subr.mxu0 0.0
    %328 = vmatpush1.msra.mxu0 %v35
    %329 = vmatprep.subr.mxu0 0.0
    %330 = vmatpush1.msra.mxu0 %v34
    %331 = vmatprep.subr.mxu0 0.0
    %332 = vmatpush1.msra.mxu0 %v33
    %333 = vmatprep.subr.mxu0 0.0
    %334 = vmatpush1.msra.mxu0 %v32
    %335 = vmatprep.subr.mxu0 0.0
    %336 = vmatpush1.msra.mxu0 %v31
    %337 = vmatprep.subr.mxu0 0.0
    %338 = vmatpush1.msra.mxu0 %v30
    %339 = vmatprep.subr.mxu0 0.0
    %340 = vmatpush2.msra.mxu0 0.0
    %341 = vmatprep.subr.mxu0 0.0
    %342 = vmatpush2.msra.mxu0 0.0
    %343 = vmatprep.subr.mxu0 0.0
    %344 = vmatpush2.msra.mxu0 0.0
    %345 = vmatprep.subr.mxu0 0.0
    %346 = vmatpush2.msra.mxu0 0.0
    %347 = vmatprep.subr.mxu0 0.0
    %348 = vmatpush2.msra.mxu0 0.0
    %349 = vmatprep.subr.mxu0 0.0
    %350 = vmatpush2.msra.mxu0 0.0
    %351 = vmatprep.subr.mxu0 0.0
    %352 = vmatpush2.msra.mxu0 0.0
    %353 = vmatprep.subr.mxu0 0.0
    %354 = vmatpush2.msra.mxu0 0.0
    %355 = vmatprep.subr.mxu0 0.0
    %356 = vmatpush2.msra.mxu0 0.0
    %357 = vmatprep.subr.mxu0 0.0
    %358 = vmatpush2.msra.mxu0 0.0
    %359 = vmatprep.subr.mxu0 0.0
    %360 = vmatpush2.msra.mxu0 0.0
    %361 = vmatprep.subr.mxu0 0.0
    %362 = vmatpush2.msra.mxu0 0.0
    %363 = vmatprep.subr.mxu0 0.0
    %364 = vmatpush2.msra.mxu0 0.0
    %365 = vmatprep.subr.mxu0 0.0
    %366 = vmatpush2.msra.mxu0 0.0
    %367 = vmatprep.subr.mxu0 0.0
    %368 = vmatpush2.msra.mxu0 0.0
    %369 = vmatprep.subr.mxu0 0.0
    %370 = vmatpush2.msra.mxu0 0.0
    %371 = vmatprep.mubr.f32.mxu0 0.0
    %372 = vmatmul.mubr.f32.gmra.mxu0 %v306
    %v373 = vpop.f32.mrf.mxu0
    %v374 = vadd.f32 0.0, %v373
    %v375 = vpop.f32.mrf.mxu0
    %376 = vdwg.mxu0
    %v377 = vadd.f32 %v153, %v374
    %v378 = vtanh.pop %v377
    %379 = vmatprep.subr.mxu0 0.0
    %380 = vmatpush1.msra.mxu0 %v45
    %381 = vmatprep.subr.mxu0 0.0
    %382 = vmatpush1.msra.mxu0 %v44
    %383 = vmatprep.subr.mxu0 0.0
    %384 = vmatpush1.msra.mxu0 %v43
    %385 = vmatprep.subr.mxu0 0.0
    %386 = vmatpush1.msra.mxu0 %v42
    %387 = vmatprep.subr.mxu0 0.0
    %388 = vmatpush1.msra.mxu0 %v41
    %389 = vmatprep.subr.mxu0 0.0
    %390 = vmatpush1.msra.mxu0 %v40
    %391 = vmatprep.subr.mxu0 0.0
    %392 = vmatpush1.msra.mxu0 %v39
    %393 = vmatprep.subr.mxu0 0.0
    %394 = vmatpush1.msra.mxu0 %v38
    %395 = vmatprep.subr.mxu0 0.0
    %396 = vmatpush1.msra.mxu0 %v37
    %397 = vmatprep.subr.mxu0 0.0
    %398 = vmatpush1.msra.mxu0 %v36
    %399 = vmatprep.subr.mxu0 0.0
    %400 = vmatpush1.msra.mxu0 %v35
    %401 = vmatprep.subr.mxu0 0.0
    %402 = vmatpush1.msra.mxu0 %v34
    %403 = vmatprep.subr.mxu0 0.0
    %404 = vmatpush1.msra.mxu0 %v33
    %405 = vmatprep.subr.mxu0 0.0
    %406 = vmatpush1.msra.mxu0 %v32
    %407 = vmatprep.subr.mxu0 0.0
    %408 = vmatpush1.msra.mxu0 %v31
    %409 = vmatprep.subr.mxu0 0.0
    %410 = vmatpush1.msra.mxu0 %v30
    %411 = vmatprep.subr.mxu0 0.0
    %412 = vmatpush2.msra.mxu0 0.0
    %413 = vmatprep.subr.mxu0 0.0
    %414 = vmatpush2.msra.mxu0 0.0
    %415 = vmatprep.subr.mxu0 0.0
    %416 = vmatpush2.msra.mxu0 0.0
    %417 = vmatprep.subr.mxu0 0.0
    %418 = vmatpush2.msra.mxu0 0.0
    %419 = vmatprep.subr.mxu0 0.0
    %420 = vmatpush2.msra.mxu0 0.0
    %421 = vmatprep.subr.mxu0 0.0
    %422 = vmatpush2.msra.mxu0 0.0
    %423 = vmatprep.subr.mxu0 0.0
    %424 = vmatpush2.msra.mxu0 0.0
    %425 = vmatprep.subr.mxu0 0.0
    %426 = vmatpush2.msra.mxu0 0.0
    %427 = vmatprep.subr.mxu0 0.0
    %428 = vmatpush2.msra.mxu0 0.0
    %429 = vmatprep.subr.mxu0 0.0
    %430 = vmatpush2.msra.mxu0 0.0
    %431 = vmatprep.subr.mxu0 0.0
    %432 = vmatpush2.msra.mxu0 0.0
    %433 = vmatprep.subr.mxu0 0.0
    %434 = vmatpush2.msra.mxu0 0.0
    %435 = vmatprep.subr.mxu0 0.0
    %436 = vmatpush2.msra.mxu0 0.0
    %437 = vmatprep.subr.mxu0 0.0
    %438 = vmatpush2.msra.mxu0 0.0
    %439 = vmatprep.subr.mxu0 0.0
    %440 = vmatpush2.msra.mxu0 0.0
    %441 = vmatprep.subr.mxu0 0.0
    %442 = vmatpush2.msra.mxu0 0.0
    %443 = vmatprep.mubr.f32.mxu0 0.0
    %444 = vmatmul.mubr.f32.gmra.mxu0 %v378
    %v445 = vpop.f32.mrf.mxu0
    %v446 = vadd.f32 0.0, %v445
    %v447 = vpop.f32.mrf.mxu0
    %448 = vdwg.mxu0
    %v449 = vadd.f32 %v154, %v446
    %v450 = vtanh.pop %v449
    %451 = vmatprep.subr.mxu0 0.0
    %452 = vmatpush1.msra.mxu0 %v45
    %453 = vmatprep.subr.mxu0 0.0
    %454 = vmatpush1.msra.mxu0 %v44
    %455 = vmatprep.subr.mxu0 0.0
    %456 = vmatpush1.msra.mxu0 %v43
    %457 = vmatprep.subr.mxu0 0.0
    %458 = vmatpush1.msra.mxu0 %v42
    %459 = vmatprep.subr.mxu0 0.0
    %460 = vmatpush1.msra.mxu0 %v41
    %461 = vmatprep.subr.mxu0 0.0
    %462 = vmatpush1.msra.mxu0 %v40
    %463 = vmatprep.subr.mxu0 0.0
    %464 = vmatpush1.msra.mxu0 %v39
    %465 = vmatprep.subr.mxu0 0.0
    %466 = vmatpush1.msra.mxu0 %v38
    %467 = vmatprep.subr.mxu0 0.0
    %468 = vmatpush1.msra.mxu0 %v37
    %469 = vmatprep.subr.mxu0 0.0
    %470 = vmatpush1.msra.mxu0 %v36
    %471 = vmatprep.subr.mxu0 0.0
    %472 = vmatpush1.msra.mxu0 %v35
    %473 = vmatprep.subr.mxu0 0.0
    %474 = vmatpush1.msra.mxu0 %v34
    %475 = vmatprep.subr.mxu0 0.0
    %476 = vmatpush1.msra.mxu0 %v33
    %477 = vmatprep.subr.mxu0 0.0
    %478 = vmatpush1.msra.mxu0 %v32
    %479 = vmatprep.subr.mxu0 0.0
    %480 = vmatpush1.msra.mxu0 %v31
    %481 = vmatprep.subr.mxu0 0.0
    %482 = vmatpush1.msra.mxu0 %v30
    %483 = vmatprep.subr.mxu0 0.0
    %484 = vmatpush2.msra.mxu0 0.0
    %485 = vmatprep.subr.mxu0 0.0
    %486 = vmatpush2.msra.mxu0 0.0
    %487 = vmatprep.subr.mxu0 0.0
    %488 = vmatpush2.msra.mxu0 0.0
    %489 = vmatprep.subr.mxu0 0.0
    %490 = vmatpush2.msra.mxu0 0.0
    %491 = vmatprep.subr.mxu0 0.0
    %492 = vmatpush2.msra.mxu0 0.0
    %493 = vmatprep.subr.mxu0 0.0
    %494 = vmatpush2.msra.mxu0 0.0
    %495 = vmatprep.subr.mxu0 0.0
    %496 = vmatpush2.msra.mxu0 0.0
    %497 = vmatprep.subr.mxu0 0.0
    %498 = vmatpush2.msra.mxu0 0.0
    %499 = vmatprep.subr.mxu0 0.0
    %500 = vmatpush2.msra.mxu0 0.0
    %501 = vmatprep.subr.mxu0 0.0
    %502 = vmatpush2.msra.mxu0 0.0
    %503 = vmatprep.subr.mxu0 0.0
    %504 = vmatpush2.msra.mxu0 0.0
    %505 = vmatprep.subr.mxu0 0.0
    %506 = vmatpush2.msra.mxu0 0.0
    %507 = vmatprep.subr.mxu0 0.0
    %508 = vmatpush2.msra.mxu0 0.0
    %509 = vmatprep.subr.mxu0 0.0
    %510 = vmatpush2.msra.mxu0 0.0
    %511 = vmatprep.subr.mxu0 0.0
    %512 = vmatpush2.msra.mxu0 0.0
    %513 = vmatprep.subr.mxu0 0.0
    %514 = vmatpush2.msra.mxu0 0.0
    %515 = vmatprep.mubr.f32.mxu0 0.0
    %516 = vmatmul.mubr.f32.gmra.mxu0 %v450
    %v517 = vpop.f32.mrf.mxu0
    %v518 = vadd.f32 0.0, %v517
    %v519 = vpop.f32.mrf.mxu0
    %520 = vdwg.mxu0
    %v521 = vadd.f32 %v155, %v518
    %v522 = vtanh.pop %v521
    %523 = vmatprep.subr.mxu0 0.0
    %524 = vmatpush1.msra.mxu0 %v45
    %525 = vmatprep.subr.mxu0 0.0
    %526 = vmatpush1.msra.mxu0 %v44
    %527 = vmatprep.subr.mxu0 0.0
    %528 = vmatpush1.msra.mxu0 %v43
    %529 = vmatprep.subr.mxu0 0.0
    %530 = vmatpush1.msra.mxu0 %v42
    %531 = vmatprep.subr.mxu0 0.0
    %532 = vmatpush1.msra.mxu0 %v41
    %533 = vmatprep.subr.mxu0 0.0
    %534 = vmatpush1.msra.mxu0 %v40
    %535 = vmatprep.subr.mxu0 0.0
    %536 = vmatpush1.msra.mxu0 %v39
    %537 = vmatprep.subr.mxu0 0.0
    %538 = vmatpush1.msra.mxu0 %v38
    %539 = vmatprep.subr.mxu0 0.0
    %540 = vmatpush1.msra.mxu0 %v37
    %541 = vmatprep.subr.mxu0 0.0
    %542 = vmatpush1.msra.mxu0 %v36
    %543 = vmatprep.subr.mxu0 0.0
    %544 = vmatpush1.msra.mxu0 %v35
    %545 = vmatprep.subr.mxu0 0.0
    %546 = vmatpush1.msra.mxu0 %v34
    %547 = vmatprep.subr.mxu0 0.0
    %548 = vmatpush1.msra.mxu0 %v33
    %549 = vmatprep.subr.mxu0 0.0
    %550 = vmatpush1.msra.mxu0 %v32
    %551 = vmatprep.subr.mxu0 0.0
    %552 = vmatpush1.msra.mxu0 %v31
    %553 = vmatprep.subr.mxu0 0.0
    %554 = vmatpush1.msra.mxu0 %v30
    %555 = vmatprep.subr.mxu0 0.0
    %556 = vmatpush2.msra.mxu0 0.0
    %557 = vmatprep.subr.mxu0 0.0
    %558 = vmatpush2.msra.mxu0 0.0
    %559 = vmatprep.subr.mxu0 0.0
    %560 = vmatpush2.msra.mxu0 0.0
    %561 = vmatprep.subr.mxu0 0.0
    %562 = vmatpush2.msra.mxu0 0.0
    %563 = vmatprep.subr.mxu0 0.0
    %564 = vmatpush2.msra.mxu0 0.0
    %565 = vmatprep.subr.mxu0 0.0
    %566 = vmatpush2.msra.mxu0 0.0
    %567 = vmatprep.subr.mxu0 0.0
    %568 = vmatpush2.msra.mxu0 0.0
    %569 = vmatprep.subr.mxu0 0.0
    %570 = vmatpush2.msra.mxu0 0.0
    %571 = vmatprep.subr.mxu0 0.0
    %572 = vmatpush2.msra.mxu0 0.0
    %573 = vmatprep.subr.mxu0 0.0
    %574 = vmatpush2.msra.mxu0 0.0
    %575 = vmatprep.subr.mxu0 0.0
    %576 = vmatpush2.msra.mxu0 0.0
    %577 = vmatprep.subr.mxu0 0.0
    %578 = vmatpush2.msra.mxu0 0.0
    %579 = vmatprep.subr.mxu0 0.0
    %580 = vmatpush2.msra.mxu0 0.0
    %581 = vmatprep.subr.mxu0 0.0
    %582 = vmatpush2.msra.mxu0 0.0
    %583 = vmatprep.subr.mxu0 0.0
    %584 = vmatpush2.msra.mxu0 0.0
    %585 = vmatprep.subr.mxu0 0.0
    %586 = vmatpush2.msra.mxu0 0.0
    %587 = vmatprep.mubr.f32.mxu0 0.0
    %588 = vmatmul.mubr.f32.gmra.mxu0 %v522
    %v589 = vpop.f32.mrf.mxu0
    %v590 = vadd.f32 0.0, %v589
    %v591 = vpop.f32.mrf.mxu0
    %592 = vdwg.mxu0
    %v593 = vadd.f32 %v156, %v590
    %v594 = vtanh.pop %v593
    %595 = vmatprep.subr.mxu0 0.0
    %596 = vmatpush1.msra.mxu0 %v45
    %597 = vmatprep.subr.mxu0 0.0
    %598 = vmatpush1.msra.mxu0 %v44
    %599 = vmatprep.subr.mxu0 0.0
    %600 = vmatpush1.msra.mxu0 %v43
    %601 = vmatprep.subr.mxu0 0.0
    %602 = vmatpush1.msra.mxu0 %v42
    %603 = vmatprep.subr.mxu0 0.0
    %604 = vmatpush1.msra.mxu0 %v41
    %605 = vmatprep.subr.mxu0 0.0
    %606 = vmatpush1.msra.mxu0 %v40
    %607 = vmatprep.subr.mxu0 0.0
    %608 = vmatpush1.msra.mxu0 %v39
    %609 = vmatprep.subr.mxu0 0.0
    %610 = vmatpush1.msra.mxu0 %v38
    %611 = vmatprep.subr.mxu0 0.0
    %612 = vmatpush1.msra.mxu0 %v37
    %613 = vmatprep.subr.mxu0 0.0
    %614 = vmatpush1.msra.mxu0 %v36
    %615 = vmatprep.subr.mxu0 0.0
    %616 = vmatpush1.msra.mxu0 %v35
    %617 = vmatprep.subr.mxu0 0.0
    %618 = vmatpush1.msra.mxu0 %v34
    %619 = vmatprep.subr.mxu0 0.0
    %620 = vmatpush1.msra.mxu0 %v33
    %621 = vmatprep.subr.mxu0 0.0
    %622 = vmatpush1.msra.mxu0 %v32
    %623 = vmatprep.subr.mxu0 0.0
    %624 = vmatpush1.msra.mxu0 %v31
    %625 = vmatprep.subr.mxu0 0.0
    %626 = vmatpush1.msra.mxu0 %v30
    %627 = vmatprep.subr.mxu0 0.0
    %628 = vmatpush2.msra.mxu0 0.0
    %629 = vmatprep.subr.mxu0 0.0
    %630 = vmatpush2.msra.mxu0 0.0
    %631 = vmatprep.subr.mxu0 0.0
    %632 = vmatpush2.msra.mxu0 0.0
    %633 = vmatprep.subr.mxu0 0.0
    %634 = vmatpush2.msra.mxu0 0.0
    %635 = vmatprep.subr.mxu0 0.0
    %636 = vmatpush2.msra.mxu0 0.0
    %637 = vmatprep.subr.mxu0 0.0
    %638 = vmatpush2.msra.mxu0 0.0
    %639 = vmatprep.subr.mxu0 0.0
    %640 = vmatpush2.msra.mxu0 0.0
    %641 = vmatprep.subr.mxu0 0.0
    %642 = vmatpush2.msra.mxu0 0.0
    %643 = vmatprep.subr.mxu0 0.0
    %644 = vmatpush2.msra.mxu0 0.0
    %645 = vmatprep.subr.mxu0 0.0
    %646 = vmatpush2.msra.mxu0 0.0
    %647 = vmatprep.subr.mxu0 0.0
    %648 = vmatpush2.msra.mxu0 0.0
    %649 = vmatprep.subr.mxu0 0.0
    %650 = vmatpush2.msra.mxu0 0.0
    %651 = vmatprep.subr.mxu0 0.0
    %652 = vmatpush2.msra.mxu0 0.0
    %653 = vmatprep.subr.mxu0 0.0
    %654 = vmatpush2.msra.mxu0 0.0
    %655 = vmatprep.subr.mxu0 0.0
    %656 = vmatpush2.msra.mxu0 0.0
    %657 = vmatprep.subr.mxu0 0.0
    %658 = vmatpush2.msra.mxu0 0.0
    %659 = vmatprep.mubr.f32.mxu0 0.0
    %660 = vmatmul.mubr.f32.gmra.mxu0 %v594
    %v661 = vpop.f32.mrf.mxu0
    %v662 = vadd.f32 0.0, %v661
    %v663 = vpop.f32.mrf.mxu0
    %664 = vdwg.mxu0
    %v665 = vadd.f32 %v157, %v662
    %v666 = vtanh.pop %v665
    %667 = vmatprep.subr.mxu0 0.0
    %668 = vmatpush1.msra.mxu0 %v45
    %669 = vmatprep.subr.mxu0 0.0
    %670 = vmatpush1.msra.mxu0 %v44
    %671 = vmatprep.subr.mxu0 0.0
    %672 = vmatpush1.msra.mxu0 %v43
    %673 = vmatprep.subr.mxu0 0.0
    %674 = vmatpush1.msra.mxu0 %v42
    %675 = vmatprep.subr.mxu0 0.0
    %676 = vmatpush1.msra.mxu0 %v41
    %677 = vmatprep.subr.mxu0 0.0
    %678 = vmatpush1.msra.mxu0 %v40
    %679 = vmatprep.subr.mxu0 0.0
    %680 = vmatpush1.msra.mxu0 %v39
    %681 = vmatprep.subr.mxu0 0.0
    %682 = vmatpush1.msra.mxu0 %v38
    %683 = vmatprep.subr.mxu0 0.0
    %684 = vmatpush1.msra.mxu0 %v37
    %685 = vmatprep.subr.mxu0 0.0
    %686 = vmatpush1.msra.mxu0 %v36
    %687 = vmatprep.subr.mxu0 0.0
    %688 = vmatpush1.msra.mxu0 %v35
    %689 = vmatprep.subr.mxu0 0.0
    %690 = vmatpush1.msra.mxu0 %v34
    %691 = vmatprep.subr.mxu0 0.0
    %692 = vmatpush1.msra.mxu0 %v33
    %693 = vmatprep.subr.mxu0 0.0
    %694 = vmatpush1.msra.mxu0 %v32
    %695 = vmatprep.subr.mxu0 0.0
    %696 = vmatpush1.msra.mxu0 %v31
    %697 = vmatprep.subr.mxu0 0.0
    %698 = vmatpush1.msra.mxu0 %v30
    %699 = vmatprep.subr.mxu0 0.0
    %700 = vmatpush2.msra.mxu0 0.0
    %701 = vmatprep.subr.mxu0 0.0
    %702 = vmatpush2.msra.mxu0 0.0
    %703 = vmatprep.subr.mxu0 0.0
    %704 = vmatpush2.msra.mxu0 0.0
    %705 = vmatprep.subr.mxu0 0.0
    %706 = vmatpush2.msra.mxu0 0.0
    %707 = vmatprep.subr.mxu0 0.0
    %708 = vmatpush2.msra.mxu0 0.0
    %709 = vmatprep.subr.mxu0 0.0
    %710 = vmatpush2.msra.mxu0 0.0
    %711 = vmatprep.subr.mxu0 0.0
    %712 = vmatpush2.msra.mxu0 0.0
    %713 = vmatprep.subr.mxu0 0.0
    %714 = vmatpush2.msra.mxu0 0.0
    %715 = vmatprep.subr.mxu0 0.0
    %716 = vmatpush2.msra.mxu0 0.0
    %717 = vmatprep.subr.mxu0 0.0
    %718 = vmatpush2.msra.mxu0 0.0
    %719 = vmatprep.subr.mxu0 0.0
    %720 = vmatpush2.msra.mxu0 0.0
    %721 = vmatprep.subr.mxu0 0.0
    %722 = vmatpush2.msra.mxu0 0.0
    %723 = vmatprep.subr.mxu0 0.0
    %724 = vmatpush2.msra.mxu0 0.0
    %725 = vmatprep.subr.mxu0 0.0
    %726 = vmatpush2.msra.mxu0 0.0
    %727 = vmatprep.subr.mxu0 0.0
    %728 = vmatpush2.msra.mxu0 0.0
    %729 = vmatprep.subr.mxu0 0.0
    %730 = vmatpush2.msra.mxu0 0.0
    %731 = vmatprep.mubr.f32.mxu0 0.0
    %732 = vmatmul.mubr.f32.gmra.mxu0 %v666
    %v733 = vpop.f32.mrf.mxu0
    %v734 = vadd.f32 0.0, %v733
    %v735 = vpop.f32.mrf.mxu0
    %736 = vdwg.mxu0
    %v737 = vadd.f32 %v158, %v734
    %v738 = vtanh.pop %v737
    %739 = vmatprep.subr.mxu0 0.0
    %740 = vmatpush1.msra.mxu0 %v45
    %741 = vmatprep.subr.mxu0 0.0
    %742 = vmatpush1.msra.mxu0 %v44
    %743 = vmatprep.subr.mxu0 0.0
    %744 = vmatpush1.msra.mxu0 %v43
    %745 = vmatprep.subr.mxu0 0.0
    %746 = vmatpush1.msra.mxu0 %v42
    %747 = vmatprep.subr.mxu0 0.0
    %748 = vmatpush1.msra.mxu0 %v41
    %749 = vmatprep.subr.mxu0 0.0
    %750 = vmatpush1.msra.mxu0 %v40
    %751 = vmatprep.subr.mxu0 0.0
    %752 = vmatpush1.msra.mxu0 %v39
    %753 = vmatprep.subr.mxu0 0.0
    %754 = vmatpush1.msra.mxu0 %v38
    %755 = vmatprep.subr.mxu0 0.0
    %756 = vmatpush1.msra.mxu0 %v37
    %757 = vmatprep.subr.mxu0 0.0
    %758 = vmatpush1.msra.mxu0 %v36
    %759 = vmatprep.subr.mxu0 0.0
    %760 = vmatpush1.msra.mxu0 %v35
    %761 = vmatprep.subr.mxu0 0.0
    %762 = vmatpush1.msra.mxu0 %v34
    %763 = vmatprep.subr.mxu0 0.0
    %764 = vmatpush1.msra.mxu0 %v33
    %765 = vmatprep.subr.mxu0 0.0
    %766 = vmatpush1.msra.mxu0 %v32
    %767 = vmatprep.subr.mxu0 0.0
    %768 = vmatpush1.msra.mxu0 %v31
    %769 = vmatprep.subr.mxu0 0.0
    %770 = vmatpush1.msra.mxu0 %v30
    %771 = vmatprep.subr.mxu0 0.0
    %772 = vmatpush2.msra.mxu0 0.0
    %773 = vmatprep.subr.mxu0 0.0
    %774 = vmatpush2.msra.mxu0 0.0
    %775 = vmatprep.subr.mxu0 0.0
    %776 = vmatpush2.msra.mxu0 0.0
    %777 = vmatprep.subr.mxu0 0.0
    %778 = vmatpush2.msra.mxu0 0.0
    %779 = vmatprep.subr.mxu0 0.0
    %780 = vmatpush2.msra.mxu0 0.0
    %781 = vmatprep.subr.mxu0 0.0
    %782 = vmatpush2.msra.mxu0 0.0
    %783 = vmatprep.subr.mxu0 0.0
    %784 = vmatpush2.msra.mxu0 0.0
    %785 = vmatprep.subr.mxu0 0.0
    %786 = vmatpush2.msra.mxu0 0.0
    %787 = vmatprep.subr.mxu0 0.0
    %788 = vmatpush2.msra.mxu0 0.0
    %789 = vmatprep.subr.mxu0 0.0
    %790 = vmatpush2.msra.mxu0 0.0
    %791 = vmatprep.subr.mxu0 0.0
    %792 = vmatpush2.msra.mxu0 0.0
    %793 = vmatprep.subr.mxu0 0.0
    %794 = vmatpush2.msra.mxu0 0.0
    %795 = vmatprep.subr.mxu0 0.0
    %796 = vmatpush2.msra.mxu0 0.0
    %797 = vmatprep.subr.mxu0 0.0
    %798 = vmatpush2.msra.mxu0 0.0
    %799 = vmatprep.subr.mxu0 0.0
    %800 = vmatpush2.msra.mxu0 0.0
    %801 = vmatprep.subr.mxu0 0.0
    %802 = vmatpush2.msra.mxu0 0.0
    %803 = vmatprep.mubr.f32.mxu0 0.0
    %804 = vmatmul.mubr.f32.gmra.mxu0 %v738
    %v805 = vpop.f32.mrf.mxu0
    %v806 = vadd.f32 0.0, %v805
    %v807 = vpop.f32.mrf.mxu0
    %808 = vdwg.mxu0
    %v809 = vadd.f32 %v159, %v806
    %v810 = vtanh.pop %v809
    %811 = vmatprep.subr.mxu0 0.0
    %812 = vmatpush1.msra.mxu0 %v45
    %813 = vmatprep.subr.mxu0 0.0
    %814 = vmatpush1.msra.mxu0 %v44
    %815 = vmatprep.subr.mxu0 0.0
    %816 = vmatpush1.msra.mxu0 %v43
    %817 = vmatprep.subr.mxu0 0.0
    %818 = vmatpush1.msra.mxu0 %v42
    %819 = vmatprep.subr.mxu0 0.0
    %820 = vmatpush1.msra.mxu0 %v41
    %821 = vmatprep.subr.mxu0 0.0
    %822 = vmatpush1.msra.mxu0 %v40
    %823 = vmatprep.subr.mxu0 0.0
    %824 = vmatpush1.msra.mxu0 %v39
    %825 = vmatprep.subr.mxu0 0.0
    %826 = vmatpush1.msra.mxu0 %v38
    %827 = vmatprep.subr.mxu0 0.0
    %828 = vmatpush1.msra.mxu0 %v37
    %829 = vmatprep.subr.mxu0 0.0
    %830 = vmatpush1.msra.mxu0 %v36
    %831 = vmatprep.subr.mxu0 0.0
    %832 = vmatpush1.msra.mxu0 %v35
    %833 = vmatprep.subr.mxu0 0.0
    %834 = vmatpush1.msra.mxu0 %v34
    %835 = vmatprep.subr.mxu0 0.0
    %836 = vmatpush1.msra.mxu0 %v33
    %837 = vmatprep.subr.mxu0 0.0
    %838 = vmatpush1.msra.mxu0 %v32
    %839 = vmatprep.subr.mxu0 0.0
    %840 = vmatpush1.msra.mxu0 %v31
    %841 = vmatprep.subr.mxu0 0.0
    %842 = vmatpush1.msra.mxu0 %v30
    %843 = vmatprep.subr.mxu0 0.0
    %844 = vmatpush2.msra.mxu0 0.0
    %845 = vmatprep.subr.mxu0 0.0
    %846 = vmatpush2.msra.mxu0 0.0
    %847 = vmatprep.subr.mxu0 0.0
    %848 = vmatpush2.msra.mxu0 0.0
    %849 = vmatprep.subr.mxu0 0.0
    %850 = vmatpush2.msra.mxu0 0.0
    %851 = vmatprep.subr.mxu0 0.0
    %852 = vmatpush2.msra.mxu0 0.0
    %853 = vmatprep.subr.mxu0 0.0
    %854 = vmatpush2.msra.mxu0 0.0
    %855 = vmatprep.subr.mxu0 0.0
    %856 = vmatpush2.msra.mxu0 0.0
    %857 = vmatprep.subr.mxu0 0.0
    %858 = vmatpush2.msra.mxu0 0.0
    %859 = vmatprep.subr.mxu0 0.0
    %860 = vmatpush2.msra.mxu0 0.0
    %861 = vmatprep.subr.mxu0 0.0
    %862 = vmatpush2.msra.mxu0 0.0
    %863 = vmatprep.subr.mxu0 0.0
    %864 = vmatpush2.msra.mxu0 0.0
    %865 = vmatprep.subr.mxu0 0.0
    %866 = vmatpush2.msra.mxu0 0.0
    %867 = vmatprep.subr.mxu0 0.0
    %868 = vmatpush2.msra.mxu0 0.0
    %869 = vmatprep.subr.mxu0 0.0
    %870 = vmatpush2.msra.mxu0 0.0
    %871 = vmatprep.subr.mxu0 0.0
    %872 = vmatpush2.msra.mxu0 0.0
    %873 = vmatprep.subr.mxu0 0.0
    %874 = vmatpush2.msra.mxu0 0.0
    %875 = vmatprep.mubr.f32.mxu0 0.0
    %876 = vmatmul.mubr.f32.gmra.mxu0 %v810
    %v877 = vpop.f32.mrf.mxu0
    %v878 = vadd.f32 0.0, %v877
    %v879 = vpop.f32.mrf.mxu0
    %880 = vdwg.mxu0
    %v881 = vadd.f32 %v160, %v878
    %v882 = vtanh.pop %v881
    %883 = vmatprep.subr.mxu0 0.0
    %884 = vmatpush1.msra.mxu0 %v45
    %885 = vmatprep.subr.mxu0 0.0
    %886 = vmatpush1.msra.mxu0 %v44
    %887 = vmatprep.subr.mxu0 0.0
    %888 = vmatpush1.msra.mxu0 %v43
    %889 = vmatprep.subr.mxu0 0.0
    %890 = vmatpush1.msra.mxu0 %v42
    %891 = vmatprep.subr.mxu0 0.0
    %892 = vmatpush1.msra.mxu0 %v41
    %893 = vmatprep.subr.mxu0 0.0
    %894 = vmatpush1.msra.mxu0 %v40
    %895 = vmatprep.subr.mxu0 0.0
    %896 = vmatpush1.msra.mxu0 %v39
    %897 = vmatprep.subr.mxu0 0.0
    %898 = vmatpush1.msra.mxu0 %v38
    %899 = vmatprep.subr.mxu0 0.0
    %900 = vmatpush1.msra.mxu0 %v37
    %901 = vmatprep.subr.mxu0 0.0
    %902 = vmatpush1.msra.mxu0 %v36
    %903 = vmatprep.subr.mxu0 0.0
    %904 = vmatpush1.msra.mxu0 %v35
    %905 = vmatprep.subr.mxu0 0.0
    %906 = vmatpush1.msra.mxu0 %v34
    %907 = vmatprep.subr.mxu0 0.0
    %908 = vmatpush1.msra.mxu0 %v33
    %909 = vmatprep.subr.mxu0 0.0
    %910 = vmatpush1.msra.mxu0 %v32
    %911 = vmatprep.subr.mxu0 0.0
    %912 = vmatpush1.msra.mxu0 %v31
    %913 = vmatprep.subr.mxu0 0.0
    %914 = vmatpush1.msra.mxu0 %v30
    %915 = vmatprep.subr.mxu0 0.0
    %916 = vmatpush2.msra.mxu0 0.0
    %917 = vmatprep.subr.mxu0 0.0
    %918 = vmatpush2.msra.mxu0 0.0
    %919 = vmatprep.subr.mxu0 0.0
    %920 = vmatpush2.msra.mxu0 0.0
    %921 = vmatprep.subr.mxu0 0.0
    %922 = vmatpush2.msra.mxu0 0.0
    %923 = vmatprep.subr.mxu0 0.0
    %924 = vmatpush2.msra.mxu0 0.0
    %925 = vmatprep.subr.mxu0 0.0
    %926 = vmatpush2.msra.mxu0 0.0
    %927 = vmatprep.subr.mxu0 0.0
    %928 = vmatpush2.msra.mxu0 0.0
    %929 = vmatprep.subr.mxu0 0.0
    %930 = vmatpush2.msra.mxu0 0.0
    %931 = vmatprep.subr.mxu0 0.0
    %932 = vmatpush2.msra.mxu0 0.0
    %933 = vmatprep.subr.mxu0 0.0
    %934 = vmatpush2.msra.mxu0 0.0
    %935 = vmatprep.subr.mxu0 0.0
    %936 = vmatpush2.msra.mxu0 0.0
    %937 = vmatprep.subr.mxu0 0.0
    %938 = vmatpush2.msra.mxu0 0.0
    %939 = vmatprep.subr.mxu0 0.0
    %940 = vmatpush2.msra.mxu0 0.0
    %941 = vmatprep.subr.mxu0 0.0
    %942 = vmatpush2.msra.mxu0 0.0
    %943 = vmatprep.subr.mxu0 0.0
    %944 = vmatpush2.msra.mxu0 0.0
    %945 = vmatprep.subr.mxu0 0.0
    %946 = vmatpush2.msra.mxu0 0.0
    %947 = vmatprep.mubr.f32.mxu0 0.0
    %948 = vmatmul.mubr.f32.gmra.mxu0 %v882
    %v949 = vpop.f32.mrf.mxu0
    %v950 = vadd.f32 0.0, %v949
    %v951 = vpop.f32.mrf.mxu0
    %952 = vdwg.mxu0
    %v953 = vadd.f32 %v161, %v950
    %v954 = vtanh.pop %v953
    %955 = vmatprep.subr.mxu0 0.0
    %956 = vmatpush1.msra.mxu0 %v45
    %957 = vmatprep.subr.mxu0 0.0
    %958 = vmatpush1.msra.mxu0 %v44
    %959 = vmatprep.subr.mxu0 0.0
    %960 = vmatpush1.msra.mxu0 %v43
    %961 = vmatprep.subr.mxu0 0.0
    %962 = vmatpush1.msra.mxu0 %v42
    %963 = vmatprep.subr.mxu0 0.0
    %964 = vmatpush1.msra.mxu0 %v41
    %965 = vmatprep.subr.mxu0 0.0
    %966 = vmatpush1.msra.mxu0 %v40
    %967 = vmatprep.subr.mxu0 0.0
    %968 = vmatpush1.msra.mxu0 %v39
    %969 = vmatprep.subr.mxu0 0.0
    %970 = vmatpush1.msra.mxu0 %v38
    %971 = vmatprep.subr.mxu0 0.0
    %972 = vmatpush1.msra.mxu0 %v37
    %973 = vmatprep.subr.mxu0 0.0
    %974 = vmatpush1.msra.mxu0 %v36
    %975 = vmatprep.subr.mxu0 0.0
    %976 = vmatpush1.msra.mxu0 %v35
    %977 = vmatprep.subr.mxu0 0.0
    %978 = vmatpush1.msra.mxu0 %v34
    %979 = vmatprep.subr.mxu0 0.0
    %980 = vmatpush1.msra.mxu0 %v33
    %981 = vmatprep.subr.mxu0 0.0
    %982 = vmatpush1.msra.mxu0 %v32
    %983 = vmatprep.subr.mxu0 0.0
    %984 = vmatpush1.msra.mxu0 %v31
    %985 = vmatprep.subr.mxu0 0.0
    %986 = vmatpush1.msra.mxu0 %v30
    %987 = vmatprep.subr.mxu0 0.0
    %988 = vmatpush2.msra.mxu0 0.0
    %989 = vmatprep.subr.mxu0 0.0
    %990 = vmatpush2.msra.mxu0 0.0
    %991 = vmatprep.subr.mxu0 0.0
    %992 = vmatpush2.msra.mxu0 0.0
    %993 = vmatprep.subr.mxu0 0.0
    %994 = vmatpush2.msra.mxu0 0.0
    %995 = vmatprep.subr.mxu0 0.0
    %996 = vmatpush2.msra.mxu0 0.0
    %997 = vmatprep.subr.mxu0 0.0
    %998 = vmatpush2.msra.mxu0 0.0
    %999 = vmatprep.subr.mxu0 0.0
    %1000 = vmatpush2.msra.mxu0 0.0
    %1001 = vmatprep.subr.mxu0 0.0
    %1002 = vmatpush2.msra.mxu0 0.0
    %1003 = vmatprep.subr.mxu0 0.0
    %1004 = vmatpush2.msra.mxu0 0.0
    %1005 = vmatprep.subr.mxu0 0.0
    %1006 = vmatpush2.msra.mxu0 0.0
    %1007 = vmatprep.subr.mxu0 0.0
    %1008 = vmatpush2.msra.mxu0 0.0
    %1009 = vmatprep.subr.mxu0 0.0
    %1010 = vmatpush2.msra.mxu0 0.0
    %1011 = vmatprep.subr.mxu0 0.0
    %1012 = vmatpush2.msra.mxu0 0.0
    %1013 = vmatprep.subr.mxu0 0.0
    %1014 = vmatpush2.msra.mxu0 0.0
    %1015 = vmatprep.subr.mxu0 0.0
    %1016 = vmatpush2.msra.mxu0 0.0
    %1017 = vmatprep.subr.mxu0 0.0
    %1018 = vmatpush2.msra.mxu0 0.0
    %1019 = vmatprep.mubr.f32.mxu0 0.0
    %1020 = vmatmul.mubr.f32.gmra.mxu0 %v954
    %v1021 = vpop.f32.mrf.mxu0
    %v1022 = vadd.f32 0.0, %v1021
    %v1023 = vpop.f32.mrf.mxu0
    %1024 = vdwg.mxu0
    %v1025 = vadd.f32 %v162, %v1022
    %v1026 = vtanh.pop %v1025
    %v1027 = vlaneseq
    %v1028 = vshrl.u32 %v1027, 7
    %v1029 = vsub.s32 2, %v1028
    %v1030 = vrot.slane %v46, %v1029
    %v1031 = vmul.f32 %v1026, %v1030
    %1032 = vadd.xlane.f32.xlu0 %v1031
    %v1033 = vpop.xlane.xlu0 %1032
    %v1034 = vlaneseq
    %v1035 = vshrl.u32 %v1034, 7
    %v1036 = vsub.s32 3, %v1035
    %v1037 = vrot.slane %v46, %v1036
    %v1038 = vadd.f32 %v1033, %v1037
    %vm1039 = vcmask 7168
    %1040 = vst.msk [vmem:[%s3] sm:$0xff] %vm1039, %v1038
    // Predicated region
    $region18: #{tpu_custom_call.1} parent=1 // pred_check
      _
    $region19: #{tpu_custom_call.1} parent=1 // pred_check_branch
      %1042 = sbr.rel (0) target = $region21
    $region20: #{tpu_custom_call.1} parent=1 // pred_region
      _
    $region21: #{tpu_custom_call.1} parent=1 // pred_fallthru
      _
    // Predicated region
    $region22: #{tpu_custom_call.1} parent=1 // pred_check
      _
    $region23: #{tpu_custom_call.1} parent=1 // pred_check_branch
      %1044 = sbr.rel (0) target = $region25
    $region24: #{tpu_custom_call.1} parent=1 // pred_region
      _
    $region25: #{tpu_custom_call.1} parent=1 // pred_fallthru
      _
    %1045 = vsyncpa [#allocation3], 1

</llo_original>
